<compile_context>
chip_gen: v6e
topology: v6e:2x2x1
jax: 0.10.0
libtpu: 0.0.40
codegen_flags: <defaults>
</compile_context>

<pallas_src>
import functools
import math

import jax
import jax.numpy as jnp
from jax import lax
from jax.experimental import pallas as pl
from jax.experimental.pallas import tpu as pltpu

LN_EPS = 1e-5
_SQRT2_INV = 1.0 / math.sqrt(2.0)


def _round_up(a, b):
    return ((a + b - 1) // b) * b


@functools.lru_cache(maxsize=None)
def _vmem_cap_bytes():
    """Physical per-core VMEM; conservative 64 MiB (v7x) fallback."""
    try:
        return int(pltpu.get_tpu_info().vmem_capacity_bytes)
    except Exception:
        return 64 * 1024 * 1024


@functools.lru_cache(maxsize=None)
def _default_row_tile():
    # 512 rows/step on 128 MiB-VMEM generations (v5e/v6e); 256 on v7x (64 MiB).
    return 512 if _vmem_cap_bytes() >= 96 * 1024 * 1024 else 256


def _ffn_kernel(x_ref, w1_ref, b1_ref, w2_ref, b2_ref, gamma_ref, beta_ref,
                o_ref):
    # x tile: (tm, D), loaded once in f32; reused for the residual path.
    x = x_ref[...].astype(jnp.float32)

    # fc1: bf16 operands on the MXU, f32 accumulation.
    h = jnp.dot(x.astype(jnp.bfloat16), w1_ref[...],
                preferred_element_type=jnp.float32)
    h = h + b1_ref[...]                                   # (tm, H) + (1, H)
    # exact-erf GELU (nn.GELU() default), f32.  (On v6e/v7x this stage could
    # run in bf16 as a further micro-opt; kept f32 to preserve exact numerics
    # and stay correct/fast on v5e.)
    h = h * (0.5 * (1.0 + lax.erf(h * _SQRT2_INV)))

    # fc2: cast the (tm, H) intermediate to bf16 right before the dot.
    y = jnp.dot(h.astype(jnp.bfloat16), w2_ref[...],
                preferred_element_type=jnp.float32)
    y = y + b2_ref[...]                                   # (tm, D) + (1, D)

    # residual add + LayerNorm over the embed dim, all f32.
    z = x + y
    mean = jnp.mean(z, axis=-1, keepdims=True)
    centered = z - mean
    var = jnp.mean(centered * centered, axis=-1, keepdims=True)
    out = centered * lax.rsqrt(var + LN_EPS) * gamma_ref[...] + beta_ref[...]

    o_ref[...] = out.astype(o_ref.dtype)


def prepare_params(w1, b1, w2, b2, gamma, beta):
    """One-time parameter prep (call ONCE, not per forward): weights cast to
    bf16 (MXU-native, half the resident VMEM); vectors become (1, C) f32
    slabs so the channel dim sits on the lane axis."""
    H = w1.shape[1]
    D = w2.shape[1]
    return (
        jnp.asarray(w1, jnp.bfloat16),
        jnp.asarray(b1, jnp.float32).reshape(1, H),
        jnp.asarray(w2, jnp.bfloat16),
        jnp.asarray(b2, jnp.float32).reshape(1, D),
        jnp.asarray(gamma, jnp.float32).reshape(1, D),
        jnp.asarray(beta, jnp.float32).reshape(1, D),
    )


@functools.partial(jax.jit, static_argnames=("tm",))
def _feed_forward_impl(x, w1, b1, w2, b2, gamma, beta, *, tm):
    B, N, D = x.shape
    H = w1.shape[1]
    M = B * N

    # Row tile: big enough to feed the MXU, but capped so the "parallel" grid
    # axis keeps >= ~4 steps for small M (keeps both v7x TensorCores and the
    # x/out DMA pipeline busy).  Sublane multiple of 8.
    tm_eff = max(8, min(tm, _round_up(-(-M // 4), 8)))
    grid = (pl.cdiv(M, tm_eff),)

    # No host-side pad / slice: last block is ragged; Pallas masks the
    # out-of-bounds rows of the output store, and any garbage in the padded
    # tail rows of the input tile stays confined to rows never written.
    x2 = x.reshape(M, D)

    # Scoped-VMEM budget: weights single-buffered (resident), x/out tiles
    # double-buffered, plus the (tm, H) f32 + bf16 intermediates; clamped to
    # the physical per-core capacity with headroom for compiler scratch.
    x_item = jnp.dtype(x.dtype).itemsize
    weight_bytes = 2 * D * H * 2                   # W1 + W2, bf16, one copy each
    param_bytes = (H + 3 * D) * 4                  # b1, b2, gamma, beta (f32)
    stream_bytes = 2 * (2 * tm_eff * D * x_item)   # double-buffered x + out tiles
    inter_bytes = tm_eff * H * (4 + 2)             # f32 intermediate + bf16 cast
    budget = weight_bytes + param_bytes + stream_bytes + inter_bytes
    vmem_limit = int(1.4 * budget) + (1 << 20)
    vmem_limit = max(vmem_limit, 8 * 1024 * 1024)
    vmem_limit = min(vmem_limit, _vmem_cap_bytes() - 12 * 1024 * 1024)

    # Constant-index operands live whole in VMEM: copied in once, no per-step
    # double buffering (single-buffered residents).
    resident = pl.BlockSpec(memory_space=pltpu.MemorySpace.VMEM)

    out2 = pl.pallas_call(
        _ffn_kernel,
        out_shape=jax.ShapeDtypeStruct((M, D), x.dtype),
        grid_spec=pltpu.PrefetchScalarGridSpec(
            num_scalar_prefetch=0,
            grid=grid,
            in_specs=[
                pl.BlockSpec((tm_eff, D), lambda i: (i, 0)),  # x row tiles
                resident,                                      # W1
                resident,                                      # b1
                resident,                                      # W2
                resident,                                      # b2
                resident,                                      # LN gamma
                resident,                                      # LN beta
            ],
            out_specs=pl.BlockSpec((tm_eff, D), lambda i: (i, 0)),
        ),
        compiler_params=pltpu.CompilerParams(
            dimension_semantics=("parallel",),
            vmem_limit_bytes=vmem_limit),
    )(x2, w1, b1, w2, b2, gamma, beta)

    return out2.reshape(B, N, D)


def feed_forward(x, params, *, tm=None):
    """x: (B, N, D); params: output of prepare_params().  Returns (B, N, D)."""
    if tm is None:
        tm = _default_row_tile()
    return _feed_forward_impl(x, *params, tm=tm)


def _reference(x, w1, b1, w2, b2, gamma, beta):
    h = x @ w1 + b1
    h = 0.5 * h * (1.0 + lax.erf(h * _SQRT2_INV))
    y = h @ w2 + b2
    z = x + y
    mean = jnp.mean(z, axis=-1, keepdims=True)
    var = jnp.mean((z - mean) ** 2, axis=-1, keepdims=True)
    return (z - mean) * lax.rsqrt(var + LN_EPS) * gamma + beta


if __name__ == "__main__":
    # Small shapes consistent with the module: (batch, seq, embed_dim).
    # N=10 makes B*N=20 non-divisible by the row tile -> exercises the
    # ragged-last-block path (no host pad, no output slice).
    B, N, D, H = 2, 10, 128, 256

    key = jax.random.PRNGKey(0)
    kx, k1, k2, k3, k4 = jax.random.split(key, 5)

    x = jax.random.normal(kx, (B, N, D), dtype=jnp.float32)

    # Deterministic parameter init (PyTorch Linear-style uniform bounds).
    bound1 = 1.0 / math.sqrt(D)
    bound2 = 1.0 / math.sqrt(H)
    w1 = jax.random.uniform(k1, (D, H), jnp.float32, -bound1, bound1)
    b1 = jax.random.uniform(k2, (H,), jnp.float32, -bound1, bound1)
    w2 = jax.random.uniform(k3, (H, D), jnp.float32, -bound2, bound2)
    b2 = jax.random.uniform(k4, (D,), jnp.float32, -bound2, bound2)
    gamma = jnp.ones((D,), jnp.float32)   # nn.LayerNorm default weight
    beta = jnp.zeros((D,), jnp.float32)   # nn.LayerNorm default bias

    # bf16 weight cast hoisted out of the call path: done exactly once here.
    params = prepare_params(w1, b1, w2, b2, gamma, beta)

    out = jax.block_until_ready(feed_forward(x, params))

    ref = _reference(x, w1, b1, w2, b2, gamma, beta)
    assert out.shape == (B, N, D)
    err = float(jnp.max(jnp.abs(out - ref)))
    # bf16 MXU operands (f32 accumulation) -> loosened tolerance vs f32 ref.
    assert err < 5e-2, f"mismatch vs JAX reference: max abs err = {err}"

    print("KERNEL_OK")
</pallas_src>

<mosaic_0001>
module attributes {stable_mosaic.version = 11 : i64} {
  func.func @_ffn_kernel(%arg0: i32, %arg1: memref<8x128xf32, #tpu.memory_space<vmem>>, %arg2: memref<128x256xbf16, #tpu.memory_space<vmem>>, %arg3: memref<1x256xf32, #tpu.memory_space<vmem>>, %arg4: memref<256x128xbf16, #tpu.memory_space<vmem>>, %arg5: memref<1x128xf32, #tpu.memory_space<vmem>>, %arg6: memref<1x128xf32, #tpu.memory_space<vmem>>, %arg7: memref<1x128xf32, #tpu.memory_space<vmem>>, %arg8: memref<8x128xf32, #tpu.memory_space<vmem>>) attributes {dimension_semantics = [#tpu.dimension_semantics<parallel>], iteration_bounds = array<i64: 3>, scalar_prefetch = 0 : i64, scratch_operands = 0 : i64, tpu.core_type = #tpu.core_type<tc>, window_params = [{transform_indices = @transform_0, window_bounds = array<i64: 8, 128>}, {pipeline_mode = #tpu.pipeline_mode<synchronous>, transform_indices = @transform_1, window_bounds = array<i64: 128, 256>}, {pipeline_mode = #tpu.pipeline_mode<synchronous>, transform_indices = @transform_2, window_bounds = array<i64: 1, 256>}, {pipeline_mode = #tpu.pipeline_mode<synchronous>, transform_indices = @transform_3, window_bounds = array<i64: 256, 128>}, {pipeline_mode = #tpu.pipeline_mode<synchronous>, transform_indices = @transform_4, window_bounds = array<i64: 1, 128>}, {pipeline_mode = #tpu.pipeline_mode<synchronous>, transform_indices = @transform_5, window_bounds = array<i64: 1, 128>}, {pipeline_mode = #tpu.pipeline_mode<synchronous>, transform_indices = @transform_6, window_bounds = array<i64: 1, 128>}, {transform_indices = @transform_7, window_bounds = array<i64: 8, 128>}]} {
    %c0 = arith.constant 0 : index
    %c0_0 = arith.constant 0 : index
    %0 = vector.load %arg1[%c0, %c0_0] : memref<8x128xf32, #tpu.memory_space<vmem>>, vector<8x128xf32>
    %1 = arith.truncf %0 : vector<8x128xf32> to vector<8x128xbf16>
    %c0_1 = arith.constant 0 : index
    %c0_2 = arith.constant 0 : index
    %2 = vector.load %arg2[%c0_1, %c0_2] : memref<128x256xbf16, #tpu.memory_space<vmem>>, vector<128x256xbf16>
    %cst = arith.constant dense<0.000000e+00> : vector<8x256xf32>
    %3 = tpu.matmul %1, %2, %cst {dimension_numbers = #tpu.dot_dimension_numbers<[1], [0], [0], [1], [0, 0, 1, 1], [], []>} : vector<8x128xbf16>, vector<128x256xbf16>, vector<8x256xf32> -> vector<8x256xf32>
    %c0_3 = arith.constant 0 : index
    %c0_4 = arith.constant 0 : index
    %4 = vector.load %arg3[%c0_3, %c0_4] : memref<1x256xf32, #tpu.memory_space<vmem>>, vector<1x256xf32>
    %5 = vector.broadcast %4 : vector<1x256xf32> to vector<8x256xf32>
    %6 = arith.addf %3, %5 : vector<8x256xf32>
    %cst_5 = arith.constant 0.707106769 : f32
    %7 = vector.broadcast %cst_5 : f32 to vector<8x256xf32>
    %8 = arith.mulf %6, %7 : vector<8x256xf32>
    %9 = math.erf %8 : vector<8x256xf32>
    %cst_6 = arith.constant 1.000000e+00 : f32
    %10 = vector.broadcast %cst_6 : f32 to vector<8x256xf32>
    %11 = arith.addf %10, %9 : vector<8x256xf32>
    %cst_7 = arith.constant 5.000000e-01 : f32
    %12 = vector.broadcast %cst_7 : f32 to vector<8x256xf32>
    %13 = arith.mulf %12, %11 : vector<8x256xf32>
    %14 = arith.mulf %6, %13 : vector<8x256xf32>
    %15 = arith.truncf %14 : vector<8x256xf32> to vector<8x256xbf16>
    %c0_8 = arith.constant 0 : index
    %c0_9 = arith.constant 0 : index
    %16 = vector.load %arg4[%c0_8, %c0_9] : memref<256x128xbf16, #tpu.memory_space<vmem>>, vector<256x128xbf16>
    %cst_10 = arith.constant dense<0.000000e+00> : vector<8x128xf32>
    %17 = tpu.matmul %15, %16, %cst_10 {dimension_numbers = #tpu.dot_dimension_numbers<[1], [0], [0], [1], [0, 0, 1, 1], [], []>} : vector<8x256xbf16>, vector<256x128xbf16>, vector<8x128xf32> -> vector<8x128xf32>
    %c0_11 = arith.constant 0 : index
    %c0_12 = arith.constant 0 : index
    %18 = vector.load %arg5[%c0_11, %c0_12] : memref<1x128xf32, #tpu.memory_space<vmem>>, vector<1x128xf32>
    %19 = vector.broadcast %18 : vector<1x128xf32> to vector<8x128xf32>
    %20 = arith.addf %17, %19 : vector<8x128xf32>
    %21 = arith.addf %0, %20 : vector<8x128xf32>
    %cst_13 = arith.constant dense<0.000000e+00> : vector<8xf32>
    %22 = vector.multi_reduction <add>, %21, %cst_13 [1] : vector<8x128xf32> to vector<8xf32>
    %23 = vector.shape_cast %22 : vector<8xf32> to vector<8x1xf32>
    %cst_14 = arith.constant 1.280000e+02 : f32
    %24 = vector.broadcast %cst_14 : f32 to vector<8x1xf32>
    %25 = arith.divf %23, %24 : vector<8x1xf32>
    %26 = vector.broadcast %25 : vector<8x1xf32> to vector<8x128xf32>
    %27 = arith.subf %21, %26 : vector<8x128xf32>
    %28 = arith.mulf %27, %27 : vector<8x128xf32>
    %cst_15 = arith.constant dense<0.000000e+00> : vector<8xf32>
    %29 = vector.multi_reduction <add>, %28, %cst_15 [1] : vector<8x128xf32> to vector<8xf32>
    %30 = vector.shape_cast %29 : vector<8xf32> to vector<8x1xf32>
    %cst_16 = arith.constant 1.280000e+02 : f32
    %31 = vector.broadcast %cst_16 : f32 to vector<8x1xf32>
    %32 = arith.divf %30, %31 : vector<8x1xf32>
    %cst_17 = arith.constant 9.99999974E-6 : f32
    %33 = vector.broadcast %cst_17 : f32 to vector<8x1xf32>
    %34 = arith.addf %32, %33 : vector<8x1xf32>
    %35 = math.rsqrt %34 : vector<8x1xf32>
    %36 = vector.broadcast %35 : vector<8x1xf32> to vector<8x128xf32>
    %37 = arith.mulf %27, %36 : vector<8x128xf32>
    %c0_18 = arith.constant 0 : index
    %c0_19 = arith.constant 0 : index
    %38 = vector.load %arg6[%c0_18, %c0_19] : memref<1x128xf32, #tpu.memory_space<vmem>>, vector<1x128xf32>
    %39 = vector.broadcast %38 : vector<1x128xf32> to vector<8x128xf32>
    %40 = arith.mulf %37, %39 : vector<8x128xf32>
    %c0_20 = arith.constant 0 : index
    %c0_21 = arith.constant 0 : index
    %41 = vector.load %arg7[%c0_20, %c0_21] : memref<1x128xf32, #tpu.memory_space<vmem>>, vector<1x128xf32>
    %42 = vector.broadcast %41 : vector<1x128xf32> to vector<8x128xf32>
    %43 = arith.addf %40, %42 : vector<8x128xf32>
    %c0_22 = arith.constant 0 : index
    %c0_23 = arith.constant 0 : index
    %44 = vector.load %arg8[%c0_22, %c0_23] : memref<8x128xf32, #tpu.memory_space<vmem>>, vector<8x128xf32>
    tpu.vector_store %arg8[%c0_22, %c0_23], %43 {strides = array<i32>} : memref<8x128xf32, #tpu.memory_space<vmem>>, vector<8x128xf32>,
    return
  }
  func.func @transform_0(%arg0: i32) -> (i32, i32) {
    %c0_i32 = arith.constant 0 : i32
    %c0_i32_0 = arith.constant 0 : i32
    return %arg0, %c0_i32 : i32, i32
  }
  func.func @transform_1(%arg0: i32) -> (i32, i32) {
    %c0_i32 = arith.constant 0 : i32
    %c0_i32_0 = arith.constant 0 : i32
    %c0_i32_1 = arith.constant 0 : i32
    return %c0_i32, %c0_i32_0 : i32, i32
  }
  func.func @transform_2(%arg0: i32) -> (i32, i32) {
    %c0_i32 = arith.constant 0 : i32
    %c0_i32_0 = arith.constant 0 : i32
    %c0_i32_1 = arith.constant 0 : i32
    return %c0_i32, %c0_i32_0 : i32, i32
  }
  func.func @transform_3(%arg0: i32) -> (i32, i32) {
    %c0_i32 = arith.constant 0 : i32
    %c0_i32_0 = arith.constant 0 : i32
    %c0_i32_1 = arith.constant 0 : i32
    return %c0_i32, %c0_i32_0 : i32, i32
  }
  func.func @transform_4(%arg0: i32) -> (i32, i32) {
    %c0_i32 = arith.constant 0 : i32
    %c0_i32_0 = arith.constant 0 : i32
    %c0_i32_1 = arith.constant 0 : i32
    return %c0_i32, %c0_i32_0 : i32, i32
  }
  func.func @transform_5(%arg0: i32) -> (i32, i32) {
    %c0_i32 = arith.constant 0 : i32
    %c0_i32_0 = arith.constant 0 : i32
    %c0_i32_1 = arith.constant 0 : i32
    return %c0_i32, %c0_i32_0 : i32, i32
  }
  func.func @transform_6(%arg0: i32) -> (i32, i32) {
    %c0_i32 = arith.constant 0 : i32
    %c0_i32_0 = arith.constant 0 : i32
    %c0_i32_1 = arith.constant 0 : i32
    return %c0_i32, %c0_i32_0 : i32, i32
  }
  func.func @transform_7(%arg0: i32) -> (i32, i32) {
    %c0_i32 = arith.constant 0 : i32
    %c0_i32_0 = arith.constant 0 : i32
    return %arg0, %c0_i32 : i32, i32
  }
}

</mosaic_0001>

<llo_original>
// kernel: _feed_forward_impl.1
$region0: #{_feed_forward_impl.1}
  #allocation0 [shape = 'u32[]', space=smem, size = 0x4, offset = 0x4, fixed_abs, tag = 'smem constant byte address 0x4 - core index']
  #allocation1 [shape = 'u32[144,128]{1,0:T(1,128)}', space=vmem, size = 0x12000, scoped, tag = 'internal scratch']
  %s0 = inlined_call_operand.vmem [shape: f32[20,128], index: 0, kind: input, shape index: {}]
  %s1 = inlined_call_operand.hbm [shape: bf16[128,256], index: 1, kind: input, shape index: {}]
  %s2 = inlined_call_operand.vmem [shape: f32[1,256], index: 2, kind: input, shape index: {}]
  %s3 = inlined_call_operand.hbm [shape: bf16[256,128], index: 3, kind: input, shape index: {}]
  %s4 = inlined_call_operand.vmem [shape: f32[1,128], index: 4, kind: input, shape index: {}]
  %s5 = inlined_call_operand.vmem [shape: f32[1,128], index: 5, kind: input, shape index: {}]
  %s6 = inlined_call_operand.vmem [shape: f32[1,128], index: 6, kind: input, shape index: {}]
  %s7 = inlined_call_operand.vmem [shape: f32[20,128], index: 7, kind: output, shape index: {}]
  %s8 = sld [smem:[#allocation0]]
  $region69: #{_feed_forward_impl.1} parent=0
    _
  %s10 = ssub.s32 1, %s8
  %s11 = scalar_select 0, %s10, %s8
  $region1: #{_feed_forward_impl.1} parent=0
    #allocation2 [shape = 'u8[65536]{0}', space=vmem, size = 0x10000, scoped, tag = 'input window, operand 1, single buffered']
    #allocation3 [shape = 's32[2]{0}', space=sflag, size = 0x8, scoped, tag = 'scoped memory for _feed_forward_impl.1']
    #allocation4 [shape = 'u8[65536]{0}', space=vmem, size = 0x10000, scoped, tag = 'input window, operand 3, single buffered']
    #allocation5 [shape = 's32[1]{0}', space=sflag, size = 0x4, scoped, tag = 'scoped memory for _feed_forward_impl.1']
    %12 = vsyncpa [#allocation3], 0
    %13 = vsyncpa [#allocation5], 0
    loop: start=0, step=1, limit=5
    $region2: #{_feed_forward_impl.1} parent=1 // loop_pre_header
      _
    $region3: #{_feed_forward_impl.1} parent=1 // loop_header
      %s15 = sphi 0, %s19
      %p16 = scmp.ge.s32.totalorder %s15, 5
      %s25 = sphi 0, %s27
      %s28 = sphi 0, %s25
      %s29 = sphi 0, %s28
      %s45 = sphi 0, %s29
      %s49 = sphi 0, %s49
      %s51 = sphi 0, %s49
      %s52 = sphi 0, %s51
      %s66 = sphi 0, %s52
      %s70 = sphi 0, %s70
      %s72 = sphi 0, %s70
      %s73 = sphi 0, %s72
      %s87 = sphi 0, %s73
      %s91 = sphi 0, %s91
      %s93 = sphi 0, %s91
      %s94 = sphi 0, %s93
      %s108 = sphi 0, %s94
      %s112 = sphi 0, %s112
      %s114 = sphi 0, %s112
      %s115 = sphi 0, %s114
      %s129 = sphi 0, %s115
      %s133 = sphi 0, %s133
      %s135 = sphi 0, %s133
      %s136 = sphi 0, %s135
      %s150 = sphi 0, %s136
      %s154 = sphi 0, %s154
      %s156 = sphi 0, %s154
      %s157 = sphi 0, %s156
      %s171 = sphi 0, %s157
      %s177 = sphi 0, %s179
      %s180 = sphi 0, %s177
      %s181 = sphi 0, %s180
      %s197 = sphi 0, %s181
    $region4: #{_feed_forward_impl.1} parent=1 // loop_header_branch
      %18 = sbr.rel (%p16) target = $region8
    $region5: #{_feed_forward_impl.1} parent=1 // loop_body
      %s20 = ssub.s32 %s15, 1
      %s21 = ssub.s32 %s15, 2
      %s22 = sadd.s32 %s15, 1
      %s23 = ssub.s32 %s15, %s22
      %p24 = scmp.eq.s32.totalorder %s23, 0
      %s26 = sadd.s32 %s25, 1
      %s27 = scalar_select %p24, %s25, %s26
      %p30 = pneg %p24
      %p31 = scmp.eq.s32.totalorder %s15, 2
      %p32 = por %p30, %p31
      %p33 = scmp.ne.s32.totalorder %s25, %s28
      %p34 = scmp.eq.s32.totalorder %s15, 0
      %p35 = por %p33, %p34
      %p36 = scmp.ne.s32.totalorder %s25, %s28
      %p37 = scmp.eq.s32.totalorder %s20, 2
      %p38 = por %p36, %p37
      %p39 = scmp.ne.s32.totalorder %s28, %s29
      %p40 = scmp.eq.s32.totalorder %s20, 0
      %p41 = por %p39, %p40
      %p42 = scmp.ne.s32.totalorder %s28, %s29
      %p43 = scmp.eq.s32.totalorder %s21, 2
      %p44 = por %p42, %p43
      %p46 = scmp.ne.s32.totalorder %s29, %s45
      %p47 = scmp.eq.s32.totalorder %s21, 0
      %p48 = por %p46, %p47
      %s50 = sadd.s32 %s49, 1
      %p53 = scmp.eq.s32.totalorder %s15, 2
      %p54 = scmp.ne.s32.totalorder %s49, %s51
      %p55 = scmp.eq.s32.totalorder %s15, 0
      %p56 = por %p54, %p55
      %p57 = scmp.ne.s32.totalorder %s49, %s51
      %p58 = scmp.eq.s32.totalorder %s20, 2
      %p59 = por %p57, %p58
      %p60 = scmp.ne.s32.totalorder %s51, %s52
      %p61 = scmp.eq.s32.totalorder %s20, 0
      %p62 = por %p60, %p61
      %p63 = scmp.ne.s32.totalorder %s51, %s52
      %p64 = scmp.eq.s32.totalorder %s21, 2
      %p65 = por %p63, %p64
      %p67 = scmp.ne.s32.totalorder %s52, %s66
      %p68 = scmp.eq.s32.totalorder %s21, 0
      %p69 = por %p67, %p68
      %s71 = sadd.s32 %s70, 1
      %p74 = scmp.eq.s32.totalorder %s15, 2
      %p75 = scmp.ne.s32.totalorder %s70, %s72
      %p76 = scmp.eq.s32.totalorder %s15, 0
      %p77 = por %p75, %p76
      %p78 = scmp.ne.s32.totalorder %s70, %s72
      %p79 = scmp.eq.s32.totalorder %s20, 2
      %p80 = por %p78, %p79
      %p81 = scmp.ne.s32.totalorder %s72, %s73
      %p82 = scmp.eq.s32.totalorder %s20, 0
      %p83 = por %p81, %p82
      %p84 = scmp.ne.s32.totalorder %s72, %s73
      %p85 = scmp.eq.s32.totalorder %s21, 2
      %p86 = por %p84, %p85
      %p88 = scmp.ne.s32.totalorder %s73, %s87
      %p89 = scmp.eq.s32.totalorder %s21, 0
      %p90 = por %p88, %p89
      %s92 = sadd.s32 %s91, 1
      %p95 = scmp.eq.s32.totalorder %s15, 2
      %p96 = scmp.ne.s32.totalorder %s91, %s93
      %p97 = scmp.eq.s32.totalorder %s15, 0
      %p98 = por %p96, %p97
      %p99 = scmp.ne.s32.totalorder %s91, %s93
      %p100 = scmp.eq.s32.totalorder %s20, 2
      %p101 = por %p99, %p100
      %p102 = scmp.ne.s32.totalorder %s93, %s94
      %p103 = scmp.eq.s32.totalorder %s20, 0
      %p104 = por %p102, %p103
      %p105 = scmp.ne.s32.totalorder %s93, %s94
      %p106 = scmp.eq.s32.totalorder %s21, 2
      %p107 = por %p105, %p106
      %p109 = scmp.ne.s32.totalorder %s94, %s108
      %p110 = scmp.eq.s32.totalorder %s21, 0
      %p111 = por %p109, %p110
      %s113 = sadd.s32 %s112, 1
      %p116 = scmp.eq.s32.totalorder %s15, 2
      %p117 = scmp.ne.s32.totalorder %s112, %s114
      %p118 = scmp.eq.s32.totalorder %s15, 0
      %p119 = por %p117, %p118
      %p120 = scmp.ne.s32.totalorder %s112, %s114
      %p121 = scmp.eq.s32.totalorder %s20, 2
      %p122 = por %p120, %p121
      %p123 = scmp.ne.s32.totalorder %s114, %s115
      %p124 = scmp.eq.s32.totalorder %s20, 0
      %p125 = por %p123, %p124
      %p126 = scmp.ne.s32.totalorder %s114, %s115
      %p127 = scmp.eq.s32.totalorder %s21, 2
      %p128 = por %p126, %p127
      %p130 = scmp.ne.s32.totalorder %s115, %s129
      %p131 = scmp.eq.s32.totalorder %s21, 0
      %p132 = por %p130, %p131
      %s134 = sadd.s32 %s133, 1
      %p137 = scmp.eq.s32.totalorder %s15, 2
      %p138 = scmp.ne.s32.totalorder %s133, %s135
      %p139 = scmp.eq.s32.totalorder %s15, 0
      %p140 = por %p138, %p139
      %p141 = scmp.ne.s32.totalorder %s133, %s135
      %p142 = scmp.eq.s32.totalorder %s20, 2
      %p143 = por %p141, %p142
      %p144 = scmp.ne.s32.totalorder %s135, %s136
      %p145 = scmp.eq.s32.totalorder %s20, 0
      %p146 = por %p144, %p145
      %p147 = scmp.ne.s32.totalorder %s135, %s136
      %p148 = scmp.eq.s32.totalorder %s21, 2
      %p149 = por %p147, %p148
      %p151 = scmp.ne.s32.totalorder %s136, %s150
      %p152 = scmp.eq.s32.totalorder %s21, 0
      %p153 = por %p151, %p152
      %s155 = sadd.s32 %s154, 1
      %p158 = scmp.eq.s32.totalorder %s15, 2
      %p159 = scmp.ne.s32.totalorder %s154, %s156
      %p160 = scmp.eq.s32.totalorder %s15, 0
      %p161 = por %p159, %p160
      %p162 = scmp.ne.s32.totalorder %s154, %s156
      %p163 = scmp.eq.s32.totalorder %s20, 2
      %p164 = por %p162, %p163
      %p165 = scmp.ne.s32.totalorder %s156, %s157
      %p166 = scmp.eq.s32.totalorder %s20, 0
      %p167 = por %p165, %p166
      %p168 = scmp.ne.s32.totalorder %s156, %s157
      %p169 = scmp.eq.s32.totalorder %s21, 2
      %p170 = por %p168, %p169
      %p172 = scmp.ne.s32.totalorder %s157, %s171
      %p173 = scmp.eq.s32.totalorder %s21, 0
      %p174 = por %p172, %p173
      %s175 = ssub.s32 %s15, %s22
      %p176 = scmp.eq.s32.totalorder %s175, 0
      %s178 = sadd.s32 %s177, 1
      %s179 = scalar_select %p176, %s177, %s178
      %p182 = pneg %p176
      %p183 = scmp.eq.s32.totalorder %s15, 2
      %p184 = por %p182, %p183
      %p185 = scmp.ne.s32.totalorder %s177, %s180
      %p186 = scmp.eq.s32.totalorder %s15, 0
      %p187 = por %p185, %p186
      %p188 = scmp.ne.s32.totalorder %s177, %s180
      %p189 = scmp.eq.s32.totalorder %s20, 2
      %p190 = por %p188, %p189
      %p191 = scmp.ne.s32.totalorder %s180, %s181
      %p192 = scmp.eq.s32.totalorder %s20, 0
      %p193 = por %p191, %p192
      %p194 = scmp.ne.s32.totalorder %s180, %s181
      %p195 = scmp.eq.s32.totalorder %s21, 2
      %p196 = por %p194, %p195
      %p198 = scmp.ne.s32.totalorder %s181, %s197
      %p199 = scmp.eq.s32.totalorder %s21, 0
      %p200 = por %p198, %p199
      %p201 = scmp.le.s32.totalorder 1, %s15
      %p202 = scmp.lt.s32.totalorder %s15, 4
      %p203 = pnand %p201, %p202
      %p204 = pneg %p203
      // Predicated region
      $region9: #{_feed_forward_impl.1} parent=5 // pred_check
        _
      $region10: #{_feed_forward_impl.1} parent=5 // pred_check_branch
        %206 = sbr.rel (%p203) target = $region12
      $region11: #{_feed_forward_impl.1} parent=5 // pred_region
        %s207 = ssub.s32 %s15, 1
        // Predicated region
        $region13: #{_feed_forward_impl.1} parent=11 // pred_check
          %p208 = pneg %p62
        $region14: #{_feed_forward_impl.1} parent=11 // pred_check_branch
          %210 = sbr.rel (%p208) target = $region16
        $region15: #{_feed_forward_impl.1} parent=11 // pred_region
          %s212 = ssub.s32 2048, 2048
          %213 = vsyncadd [#allocation3], %s212
          %s214 = sshll.u32 [#allocation2], 4
          %s215 = int_to_ptr.vmem [resolvable:$true] %s214
          %220 = dma.hbm_to_vmem [thread:$0]  %s1, 2048, %s215, [#allocation3], 128, 128, 8
        $region16: #{_feed_forward_impl.1} parent=11 // pred_fallthru
          _
        // Predicated region
        $region17: #{_feed_forward_impl.1} parent=11 // pred_check
          %p221 = pneg %p83
        $region18: #{_feed_forward_impl.1} parent=11 // pred_check_branch
          %223 = sbr.rel (%p221) target = $region20
        $region19: #{_feed_forward_impl.1} parent=11 // pred_region
          _
        $region20: #{_feed_forward_impl.1} parent=11 // pred_fallthru
          _
        // Predicated region
        $region21: #{_feed_forward_impl.1} parent=11 // pred_check
          %p224 = pneg %p104
        $region22: #{_feed_forward_impl.1} parent=11 // pred_check_branch
          %226 = sbr.rel (%p224) target = $region24
        $region23: #{_feed_forward_impl.1} parent=11 // pred_region
          %s228 = ssub.s32 2048, 2048
          %229 = vsyncadd [#allocation5], %s228
          %s230 = sshll.u32 [#allocation4], 4
          %s231 = int_to_ptr.vmem [resolvable:$true] %s230
          %236 = dma.hbm_to_vmem [thread:$0]  %s3, 2048, %s231, [#allocation5], 64, 64, 4
        $region24: #{_feed_forward_impl.1} parent=11 // pred_fallthru
          _
        // Predicated region
        $region25: #{_feed_forward_impl.1} parent=11 // pred_check
          %p237 = pneg %p125
        $region26: #{_feed_forward_impl.1} parent=11 // pred_check_branch
          %239 = sbr.rel (%p237) target = $region28
        $region27: #{_feed_forward_impl.1} parent=11 // pred_region
          _
        $region28: #{_feed_forward_impl.1} parent=11 // pred_fallthru
          _
        // Predicated region
        $region29: #{_feed_forward_impl.1} parent=11 // pred_check
          %p240 = pneg %p146
        $region30: #{_feed_forward_impl.1} parent=11 // pred_check_branch
          %242 = sbr.rel (%p240) target = $region32
        $region31: #{_feed_forward_impl.1} parent=11 // pred_region
          _
        $region32: #{_feed_forward_impl.1} parent=11 // pred_fallthru
          _
        // Predicated region
        $region33: #{_feed_forward_impl.1} parent=11 // pred_check
          %p243 = pneg %p167
        $region34: #{_feed_forward_impl.1} parent=11 // pred_check_branch
          %245 = sbr.rel (%p243) target = $region36
        $region35: #{_feed_forward_impl.1} parent=11 // pred_region
          _
        $region36: #{_feed_forward_impl.1} parent=11 // pred_fallthru
          _
      $region12: #{_feed_forward_impl.1} parent=5 // pred_fallthru
        _
      %p246 = scmp.lt.s32.totalorder %s15, 3
      // Predicated region
      $region37: #{_feed_forward_impl.1} parent=5 // pred_check
        %p247 = pneg %p246
      $region38: #{_feed_forward_impl.1} parent=5 // pred_check_branch
        %249 = sbr.rel (%p247) target = $region40
      $region39: #{_feed_forward_impl.1} parent=5 // pred_region
        // Predicated region
        $region41: #{_feed_forward_impl.1} parent=39 // pred_check
          %p250 = pneg %p35
        $region42: #{_feed_forward_impl.1} parent=39 // pred_check_branch
          %252 = sbr.rel (%p250) target = $region44
        $region43: #{_feed_forward_impl.1} parent=39 // pred_region
          %p253 = scmp.lt.s32.totalorder %s15, 2
          %s254 = scalar_select %p253, %s15, 2
          %s255 = smul.addr %s254, 8
          %s256 = scalar_lea.vmem %s0, %s255
        $region44: #{_feed_forward_impl.1} parent=39 // pred_fallthru
          _
      $region40: #{_feed_forward_impl.1} parent=5 // pred_fallthru
        _
      %p257 = scmp.le.s32.totalorder 1, %s15
      %p258 = scmp.lt.s32.totalorder %s15, 4
      %p259 = pnand %p257, %p258
      %p260 = pneg %p259
      // Predicated region
      $region45: #{_feed_forward_impl.1} parent=5 // pred_check
        _
      $region46: #{_feed_forward_impl.1} parent=5 // pred_check_branch
        %262 = sbr.rel (%p259) target = $region48
      $region47: #{_feed_forward_impl.1} parent=5 // pred_region
        %s263 = ssub.s32 %s15, 1
        // Predicated region
        $region49: #{_feed_forward_impl.1} parent=47 // pred_check
          %p264 = pneg %p62
        $region50: #{_feed_forward_impl.1} parent=47 // pred_check_branch
          %266 = sbr.rel (%p264) target = $region52
        $region51: #{_feed_forward_impl.1} parent=47 // pred_region
          %267 = dma.done [#allocation3], 2048
        $region52: #{_feed_forward_impl.1} parent=47 // pred_fallthru
          _
        // Predicated region
        $region53: #{_feed_forward_impl.1} parent=47 // pred_check
          %p268 = pneg %p104
        $region54: #{_feed_forward_impl.1} parent=47 // pred_check_branch
          %270 = sbr.rel (%p268) target = $region56
        $region55: #{_feed_forward_impl.1} parent=47 // pred_region
          %271 = dma.done [#allocation5], 2048
        $region56: #{_feed_forward_impl.1} parent=47 // pred_fallthru
          _
        %p272 = scmp.lt.s32.totalorder %s20, 2
        %s273 = scalar_select %p272, %s20, 2
        %s274 = smul.addr %s273, 8
        %s275 = scalar_lea.vmem %s0, %s274
        %p276 = pneg %p41
        %p277 = pneg %p38
        %p278 = pneg %p62
        %p279 = pneg %p59
        %p280 = pneg %p83
        %p281 = pneg %p80
        %p282 = pneg %p104
        %p283 = pneg %p101
        %p284 = pneg %p125
        %p285 = pneg %p122
        %p286 = pneg %p146
        %p287 = pneg %p143
        %p288 = pneg %p167
        %p289 = pneg %p164
        %p290 = pneg %p193
        %p291 = pneg %p190
        %p292 = scmp.lt.s32.totalorder %s20, 2
        %s293 = scalar_select %p292, %s20, 2
        %s294 = smul.addr %s293, 8
        %s295 = scalar_lea.vmem %s7, %s294
        %p296 = scmp.lt.s32.totalorder %s20, 2
        %s297 = scalar_select %p296, %s20, 2
        %s298 = smul.addr %s297, 8
        %s299 = scalar_lea.vmem %s0, %s298
        %p300 = scmp.lt.s32.totalorder %s20, 2
        %s301 = scalar_select %p300, %s20, 2
        %s302 = smul.addr %s301, 8
        %s303 = scalar_lea.vmem %s7, %s302
        %v305 = vld [vmem:[%s299] sm:$0xff]
        %v306 = vpack.c.bf16 %v305, %v305
        %v307 = vld [vmem:[#allocation2] sm:$0xff]
        %v308 = vld [vmem:[#allocation2 + $0x8] sm:$0xff]
        %v309 = vld [vmem:[#allocation2 + $0x10] sm:$0xff]
        %v310 = vld [vmem:[#allocation2 + $0x18] sm:$0xff]
        %v311 = vld [vmem:[#allocation2 + $0x20] sm:$0xff]
        %v312 = vld [vmem:[#allocation2 + $0x28] sm:$0xff]
        %v313 = vld [vmem:[#allocation2 + $0x30] sm:$0xff]
        %v314 = vld [vmem:[#allocation2 + $0x38] sm:$0xff]
        %v315 = vld [vmem:[#allocation2 + $0x40] sm:$0xff]
        %v316 = vld [vmem:[#allocation2 + $0x48] sm:$0xff]
        %v317 = vld [vmem:[#allocation2 + $0x50] sm:$0xff]
        %v318 = vld [vmem:[#allocation2 + $0x58] sm:$0xff]
        %v319 = vld [vmem:[#allocation2 + $0x60] sm:$0xff]
        %v320 = vld [vmem:[#allocation2 + $0x68] sm:$0xff]
        %v321 = vld [vmem:[#allocation2 + $0x70] sm:$0xff]
        %v322 = vld [vmem:[#allocation2 + $0x78] sm:$0xff]
        %v323 = vld [vmem:[%s2] sm:$0x3]
        %v325 = vlaneseq
        %v326 = vshrl.u32 %v325, 7
        %v327 = vsub.s32 0, %v326
        %v328 = vrot.slane %v323, %v327
        %v329 = vlaneseq
        %v330 = vshrl.u32 %v329, 7
        %v331 = vsub.s32 1, %v330
        %v332 = vrot.slane %v323, %v331
        %v351 = vunpack.c.l.b16 %v307
        %v352 = vunpack.c.h.b16 %v307
        %v353 = vunpack.c.l.b16 %v308
        %v354 = vunpack.c.h.b16 %v308
        %v355 = vunpack.c.l.b16 %v309
        %v356 = vunpack.c.h.b16 %v309
        %v357 = vunpack.c.l.b16 %v310
        %v358 = vunpack.c.h.b16 %v310
        %v359 = vunpack.c.l.b16 %v311
        %v360 = vunpack.c.h.b16 %v311
        %v361 = vunpack.c.l.b16 %v312
        %v362 = vunpack.c.h.b16 %v312
        %v363 = vunpack.c.l.b16 %v313
        %v364 = vunpack.c.h.b16 %v313
        %v365 = vunpack.c.l.b16 %v314
        %v366 = vunpack.c.h.b16 %v314
        %v367 = vunpack.c.l.b16 %v315
        %v368 = vunpack.c.h.b16 %v315
        %v369 = vunpack.c.l.b16 %v316
        %v370 = vunpack.c.h.b16 %v316
        %v371 = vunpack.c.l.b16 %v317
        %v372 = vunpack.c.h.b16 %v317
        %v373 = vunpack.c.l.b16 %v318
        %v374 = vunpack.c.h.b16 %v318
        %v375 = vunpack.c.l.b16 %v319
        %v376 = vunpack.c.h.b16 %v319
        %v377 = vunpack.c.l.b16 %v320
        %v378 = vunpack.c.h.b16 %v320
        %v379 = vunpack.c.l.b16 %v321
        %v380 = vunpack.c.h.b16 %v321
        %v381 = vunpack.c.l.b16 %v322
        %v382 = vunpack.c.h.b16 %v322
        %v383 = vpack.c.b16 %v353, %v351
        %v384 = vpack.c.b16 %v354, %v352
        %v385 = vpack.c.b16 %v357, %v355
        %v386 = vpack.c.b16 %v358, %v356
        %v387 = vpack.c.b16 %v361, %v359
        %v388 = vpack.c.b16 %v362, %v360
        %v389 = vpack.c.b16 %v365, %v363
        %v390 = vpack.c.b16 %v366, %v364
        %v391 = vpack.c.b16 %v369, %v367
        %v392 = vpack.c.b16 %v370, %v368
        %v393 = vpack.c.b16 %v373, %v371
        %v394 = vpack.c.b16 %v374, %v372
        %v395 = vpack.c.b16 %v377, %v375
        %v396 = vpack.c.b16 %v378, %v376
        %v397 = vpack.c.b16 %v381, %v379
        %v398 = vpack.c.b16 %v382, %v380
        %415 = vmatprep.subr.bf16.mxu0 %v398
        %416 = vmatpush1.bf16.msra.mxu0 %v397
        %417 = vmatprep.subr.bf16.mxu0 %v396
        %418 = vmatpush1.bf16.msra.mxu0 %v395
        %419 = vmatprep.subr.bf16.mxu0 %v394
        %420 = vmatpush1.bf16.msra.mxu0 %v393
        %421 = vmatprep.subr.bf16.mxu0 %v392
        %422 = vmatpush1.bf16.msra.mxu0 %v391
        %423 = vmatprep.subr.bf16.mxu0 %v390
        %424 = vmatpush1.bf16.msra.mxu0 %v389
        %425 = vmatprep.subr.bf16.mxu0 %v388
        %426 = vmatpush1.bf16.msra.mxu0 %v387
        %427 = vmatprep.subr.bf16.mxu0 %v386
        %428 = vmatpush1.bf16.msra.mxu0 %v385
        %429 = vmatprep.subr.bf16.mxu0 %v384
        %430 = vmatpush1.bf16.msra.mxu0 %v383
        %431 = vmatprep.subr.bf16.mxu0 0
        %432 = vmatpush2.bf16.msra.mxu0 0
        %433 = vmatprep.subr.bf16.mxu0 0
        %434 = vmatpush2.bf16.msra.mxu0 0
        %435 = vmatprep.subr.bf16.mxu0 0
        %436 = vmatpush2.bf16.msra.mxu0 0
        %437 = vmatprep.subr.bf16.mxu0 0
        %438 = vmatpush2.bf16.msra.mxu0 0
        %439 = vmatprep.subr.bf16.mxu0 0
        %440 = vmatpush2.bf16.msra.mxu0 0
        %441 = vmatprep.subr.bf16.mxu0 0
        %442 = vmatpush2.bf16.msra.mxu0 0
        %443 = vmatprep.subr.bf16.mxu0 0
        %444 = vmatpush2.bf16.msra.mxu0 0
        %445 = vmatprep.subr.bf16.mxu0 0
        %446 = vmatpush2.bf16.msra.mxu0 0
        %447 = vmatprep.mubr.bf16.mxu0 0
        %448 = vmatmul.mubr.bf16.gmra.mxu0 %v306
        %v449 = vpop.f32.mrf.mxu0
        %v450 = vadd.f32 %v328, %v449
        %v451 = vpop.f32.mrf.mxu0
        %v452 = vadd.f32 %v332, %v451
        %v453 = vpop.f32.mrf.mxu0
        %v454 = vpop.f32.mrf.mxu0
        %455 = vdwg.mxu0
        %v456 = vmul.f32 %v450, 0.70710677
        %v457 = vmul.f32 %v452, 0.70710677
        %v458 = verf.f32.pop %v456
        %v459 = verf.f32.pop %v457
        %v460 = vadd.f32 %v458, 1.0
        %v461 = vadd.f32 %v459, 1.0
        %v462 = vmul.f32 %v460, 0.5
        %v463 = vmul.f32 %v461, 0.5
        %v464 = vmul.f32 %v450, %v462
        %v465 = vmul.f32 %v452, %v463
        %v466 = vpack.c.bf16 %v464, %v464
        %v467 = vpack.c.bf16 %v465, %v465
        %v468 = vld [vmem:[#allocation4] sm:$0xf]
        %v469 = vld [vmem:[#allocation4 + $0x4] sm:$0xf]
        %v470 = vld [vmem:[#allocation4 + $0x8] sm:$0xf]
        %v471 = vld [vmem:[#allocation4 + $0xc] sm:$0xf]
        %v472 = vld [vmem:[#allocation4 + $0x10] sm:$0xf]
        %v473 = vld [vmem:[#allocation4 + $0x14] sm:$0xf]
        %v474 = vld [vmem:[#allocation4 + $0x18] sm:$0xf]
        %v475 = vld [vmem:[#allocation4 + $0x1c] sm:$0xf]
        %v476 = vld [vmem:[#allocation4 + $0x20] sm:$0xf]
        %v477 = vld [vmem:[#allocation4 + $0x24] sm:$0xf]
        %v478 = vld [vmem:[#allocation4 + $0x28] sm:$0xf]
        %v479 = vld [vmem:[#allocation4 + $0x2c] sm:$0xf]
        %v480 = vld [vmem:[#allocation4 + $0x30] sm:$0xf]
        %v481 = vld [vmem:[#allocation4 + $0x34] sm:$0xf]
        %v482 = vld [vmem:[#allocation4 + $0x38] sm:$0xf]
        %v483 = vld [vmem:[#allocation4 + $0x3c] sm:$0xf]
        %v484 = vld [vmem:[#allocation4 + $0x40] sm:$0xf]
        %v485 = vld [vmem:[#allocation4 + $0x44] sm:$0xf]
        %v486 = vld [vmem:[#allocation4 + $0x48] sm:$0xf]
        %v487 = vld [vmem:[#allocation4 + $0x4c] sm:$0xf]
        %v488 = vld [vmem:[#allocation4 + $0x50] sm:$0xf]
        %v489 = vld [vmem:[#allocation4 + $0x54] sm:$0xf]
        %v490 = vld [vmem:[#allocation4 + $0x58] sm:$0xf]
        %v491 = vld [vmem:[#allocation4 + $0x5c] sm:$0xf]
        %v492 = vld [vmem:[#allocation4 + $0x60] sm:$0xf]
        %v493 = vld [vmem:[#allocation4 + $0x64] sm:$0xf]
        %v494 = vld [vmem:[#allocation4 + $0x68] sm:$0xf]
        %v495 = vld [vmem:[#allocation4 + $0x6c] sm:$0xf]
        %v496 = vld [vmem:[#allocation4 + $0x70] sm:$0xf]
        %v497 = vld [vmem:[#allocation4 + $0x74] sm:$0xf]
        %v498 = vld [vmem:[#allocation4 + $0x78] sm:$0xf]
        %v499 = vld [vmem:[#allocation4 + $0x7c] sm:$0xf]
        %v500 = vld [vmem:[%s4] sm:$0x1]
        %v502 = vlaneseq
        %v503 = vshrl.u32 %v502, 7
        %v504 = vsub.s32 0, %v503
        %v505 = vrot.slane %v500, %v504
        %v539 = vunpack.c.l.b16 %v468
        %v540 = vunpack.c.l.b16 %v469
        %v541 = vunpack.c.l.b16 %v470
        %v542 = vunpack.c.l.b16 %v471
        %v543 = vunpack.c.l.b16 %v472
        %v544 = vunpack.c.l.b16 %v473
        %v545 = vunpack.c.l.b16 %v474
        %v546 = vunpack.c.l.b16 %v475
        %v547 = vunpack.c.l.b16 %v476
        %v548 = vunpack.c.l.b16 %v477
        %v549 = vunpack.c.l.b16 %v478
        %v550 = vunpack.c.l.b16 %v479
        %v551 = vunpack.c.l.b16 %v480
        %v552 = vunpack.c.l.b16 %v481
        %v553 = vunpack.c.l.b16 %v482
        %v554 = vunpack.c.l.b16 %v483
        %v555 = vunpack.c.l.b16 %v484
        %v556 = vunpack.c.l.b16 %v485
        %v557 = vunpack.c.l.b16 %v486
        %v558 = vunpack.c.l.b16 %v487
        %v559 = vunpack.c.l.b16 %v488
        %v560 = vunpack.c.l.b16 %v489
        %v561 = vunpack.c.l.b16 %v490
        %v562 = vunpack.c.l.b16 %v491
        %v563 = vunpack.c.l.b16 %v492
        %v564 = vunpack.c.l.b16 %v493
        %v565 = vunpack.c.l.b16 %v494
        %v566 = vunpack.c.l.b16 %v495
        %v567 = vunpack.c.l.b16 %v496
        %v568 = vunpack.c.l.b16 %v497
        %v569 = vunpack.c.l.b16 %v498
        %v570 = vunpack.c.l.b16 %v499
        %v571 = vpack.c.b16 %v540, %v539
        %v572 = vpack.c.b16 %v542, %v541
        %v573 = vpack.c.b16 %v544, %v543
        %v574 = vpack.c.b16 %v546, %v545
        %v575 = vpack.c.b16 %v548, %v547
        %v576 = vpack.c.b16 %v550, %v549
        %v577 = vpack.c.b16 %v552, %v551
        %v578 = vpack.c.b16 %v554, %v553
        %v579 = vpack.c.b16 %v556, %v555
        %v580 = vpack.c.b16 %v558, %v557
        %v581 = vpack.c.b16 %v560, %v559
        %v582 = vpack.c.b16 %v562, %v561
        %v583 = vpack.c.b16 %v564, %v563
        %v584 = vpack.c.b16 %v566, %v565
        %v585 = vpack.c.b16 %v568, %v567
        %v586 = vpack.c.b16 %v570, %v569
        %603 = vmatprep.subr.bf16.mxu0 0
        %604 = vmatpush1.bf16.msra.mxu0 %v578
        %605 = vmatprep.subr.bf16.mxu0 0
        %606 = vmatpush1.bf16.msra.mxu0 %v577
        %607 = vmatprep.subr.bf16.mxu0 0
        %608 = vmatpush1.bf16.msra.mxu0 %v576
        %609 = vmatprep.subr.bf16.mxu0 0
        %610 = vmatpush1.bf16.msra.mxu0 %v575
        %611 = vmatprep.subr.bf16.mxu0 0
        %612 = vmatpush1.bf16.msra.mxu0 %v574
        %613 = vmatprep.subr.bf16.mxu0 0
        %614 = vmatpush1.bf16.msra.mxu0 %v573
        %615 = vmatprep.subr.bf16.mxu0 0
        %616 = vmatpush1.bf16.msra.mxu0 %v572
        %617 = vmatprep.subr.bf16.mxu0 0
        %618 = vmatpush1.bf16.msra.mxu0 %v571
        %619 = vmatprep.subr.bf16.mxu0 0
        %620 = vmatpush2.bf16.msra.mxu0 %v586
        %621 = vmatprep.subr.bf16.mxu0 0
        %622 = vmatpush2.bf16.msra.mxu0 %v585
        %623 = vmatprep.subr.bf16.mxu0 0
        %624 = vmatpush2.bf16.msra.mxu0 %v584
        %625 = vmatprep.subr.bf16.mxu0 0
        %626 = vmatpush2.bf16.msra.mxu0 %v583
        %627 = vmatprep.subr.bf16.mxu0 0
        %628 = vmatpush2.bf16.msra.mxu0 %v582
        %629 = vmatprep.subr.bf16.mxu0 0
        %630 = vmatpush2.bf16.msra.mxu0 %v581
        %631 = vmatprep.subr.bf16.mxu0 0
        %632 = vmatpush2.bf16.msra.mxu0 %v580
        %633 = vmatprep.subr.bf16.mxu0 0
        %634 = vmatpush2.bf16.msra.mxu0 %v579
        %635 = vmatprep.mubr.bf16.mxu0 %v467
        %636 = vmatmul.mubr.bf16.gmra.mxu0 %v466
        %v637 = vpop.f32.mrf.mxu0
        %v638 = vadd.f32 %v505, %v637
        %v639 = vpop.f32.mrf.mxu0
        %v640 = vpop.f32.mrf.mxu0
        %v641 = vpop.f32.mrf.mxu0
        %642 = vdwg.mxu0
        %v643 = vadd.f32 %v305, %v638
        %644 = vadd.xlane.f32.xlu0 %v643
        %v645 = vpop.xlane.xlu0 %644
        %v646 = vrcp.pop 128.0
        %v647 = vmul.f32 %v645, %v646
        %v648 = vsub.f32 %v643, %v647
        %v649 = vmul.f32 %v648, %v648
        %650 = vadd.xlane.f32.xlu0 %v649
        %v651 = vpop.xlane.xlu0 %650
        %v652 = vmul.f32 %v651, %v646
        %v653 = vadd.f32 %v652, 1e-05
        %v654 = vrsqrt.pop %v653
        %v655 = vmul.f32 %v648, %v654
        %v656 = vld [vmem:[%s5] sm:$0x1]
        %v658 = vlaneseq
        %v659 = vshrl.u32 %v658, 7
        %v660 = vsub.s32 0, %v659
        %v661 = vrot.slane %v656, %v660
        %v663 = vmul.f32 %v655, %v661
        %v664 = vld [vmem:[%s6] sm:$0x1]
        %v666 = vlaneseq
        %v667 = vshrl.u32 %v666, 7
        %v668 = vsub.s32 0, %v667
        %v669 = vrot.slane %v664, %v668
        %v671 = vadd.f32 %v663, %v669
        %672 = vst [vmem:[%s303] sm:$0xff] %v671
        %p673 = scmp.lt.s32.totalorder %s20, 2
        %s674 = scalar_select %p673, %s20, 2
        %s675 = smul.addr %s674, 8
        %s676 = scalar_lea.vmem %s7, %s675
        // Predicated region
        $region57: #{_feed_forward_impl.1} parent=47 // pred_check
          %p677 = pneg %p190
        $region58: #{_feed_forward_impl.1} parent=47 // pred_check_branch
          %679 = sbr.rel (%p677) target = $region60
        $region59: #{_feed_forward_impl.1} parent=47 // pred_region
          _
        $region60: #{_feed_forward_impl.1} parent=47 // pred_fallthru
          _
      $region48: #{_feed_forward_impl.1} parent=5 // pred_fallthru
        _
      %p680 = scmp.le.s32.totalorder 2, %s15
      // Predicated region
      $region61: #{_feed_forward_impl.1} parent=5 // pred_check
        %p681 = pneg %p680
      $region62: #{_feed_forward_impl.1} parent=5 // pred_check_branch
        %683 = sbr.rel (%p681) target = $region64
      $region63: #{_feed_forward_impl.1} parent=5 // pred_region
        %s684 = ssub.s32 %s15, 2
        // Predicated region
        $region65: #{_feed_forward_impl.1} parent=63 // pred_check
          %p685 = pneg %p196
        $region66: #{_feed_forward_impl.1} parent=63 // pred_check_branch
          %687 = sbr.rel (%p685) target = $region68
        $region67: #{_feed_forward_impl.1} parent=63 // pred_region
          %p688 = scmp.lt.s32.totalorder %s21, 2
          %s689 = scalar_select %p688, %s21, 2
          %s690 = smul.addr %s689, 8
          %s691 = scalar_lea.vmem %s7, %s690
        $region68: #{_feed_forward_impl.1} parent=63 // pred_fallthru
          _
      $region64: #{_feed_forward_impl.1} parent=5 // pred_fallthru
        _
    $region6: #{_feed_forward_impl.1} parent=1 // loop_footer
      %s19 = sadd.s32 1, %s15
    $region7: #{_feed_forward_impl.1} parent=1 // loop_footer_branch
      %14 = sbr.rel target = $region3
    $region8: #{_feed_forward_impl.1} parent=1 // loop_exit
      _
    %692 = vsyncpa [#allocation3], 1
    %s693 = scalar_lea.sflag [#allocation3], 1
    %694 = vsyncpa %s693, 1
    %695 = vsyncpa [#allocation5], 1

</llo_original>
